<compile_context>
chip_gen: v7x
topology: tpu7x:2x2x1
jax: 0.10.0
libtpu: 0.0.40
codegen_flags: <defaults>
</compile_context>

<pallas_src>
import functools

import jax
import jax.numpy as jnp
from jax import lax
from jax.experimental import pallas as pl
from jax.experimental.pallas import tpu as pltpu

EPS = 1e-6      # default eps of nn.PairwiseDistance / nn.TripletMarginLoss
MARGIN = 0.0    # TripletMarginLoss(margin=0.0)

_VMEM_DATA_BUDGET = 36 << 20   # budget for blocks + accumulators (v7x has 64 MiB/TC)


def _round_up(x, m):
    return ((x + m - 1) // m) * m


def _pick_tile(total, cap):
    """Largest multiple of 128 that divides `total` (a 128-multiple) and is <= cap."""
    best = 128
    t = 256
    while t <= min(total, cap):
        if total % t == 0:
            best = t
        t += 128
    return best


def _pick_tj(bs_pad, ti, tk, budget_bytes, cap=None):
    """Largest candidate tile (multiple of 128 dividing bs_pad) fitting the VMEM budget."""
    best = 128
    limit = bs_pad if cap is None else min(bs_pad, cap)
    t = 128
    while t <= limit:
        if bs_pad % t == 0:
            need = (2 * (ti + t) * tk * 4     # double-buffered a1 / a2 blocks
                    + 3 * t * ti * 4          # gram accumulator + epilogue temporaries
                    + 2 * t * 128 * 4)        # labels2 (tj,1) block pads to 128 lanes
            if need <= budget_bytes:
                best = t
        t += 128
    return best


def _md_triplet_kernel(l1_ref, l2_ref, a1_ref, a2_ref,       # inputs
                       hinge_ref, valid_ref,                  # outputs (lane-dense rows)
                       gram_acc, dp2_run, dn2_run,            # VMEM scratch
                       *, bs):
    i = pl.program_id(0)        # anchor tile     ("parallel")
    j = pl.program_id(1)        # candidate tile  ("arbitrary")
    k = pl.program_id(2)        # feature tile    ("arbitrary", innermost)
    nj = pl.num_programs(1)
    nk = pl.num_programs(2)
    tj, ti = gram_acc.shape

    @pl.when(jnp.logical_and(j == 0, k == 0))
    def _():
        dp2_run[...] = jnp.full(dp2_run.shape, -jnp.inf, dp2_run.dtype)
        dn2_run[...] = jnp.full(dn2_run.shape, jnp.inf, dn2_run.dtype)

    @pl.when(k == 0)
    def _():
        gram_acc[...] = jnp.zeros(gram_acc.shape, gram_acc.dtype)

    # d2[j_local, i_local] partial sums: NT contraction, f32 accumulation on the MXU.
    # Thanks to the augmented feature columns, after the last k-step gram_acc holds
    # the full eps-folded squared PairwiseDistance.
    gram_acc[...] += lax.dot_general(
        a2_ref[...], a1_ref[...], (((1,), (1,)), ((), ())),
        preferred_element_type=jnp.float32)

    @pl.when(k == nk - 1)
    def _():
        d2 = gram_acc[...]                                   # (tj, ti) squared distances
        lbl = l2_ref[...] == l1_ref[...]                     # (tj,1)==(1,ti) -> (tj,ti)
        cand_ok = (j * tj + lax.broadcasted_iota(jnp.int32, (tj, ti), 0)) < bs
        pos_mask = jnp.logical_and(lbl, cand_ok)
        neg_mask = jnp.logical_and(jnp.logical_not(lbl), cand_ok)
        # Hardest positive / hardest negative mined on SQUARED distances
        # (sqrt is monotonic, so argmax/argmin are unchanged); running fold over j-tiles.
        dp2_run[...] = jnp.maximum(
            dp2_run[...],
            jnp.max(jnp.where(pos_mask, d2, -jnp.inf), axis=0, keepdims=True))
        dn2_run[...] = jnp.minimum(
            dn2_run[...],
            jnp.min(jnp.where(neg_mask, d2, jnp.inf), axis=0, keepdims=True))

    @pl.when(jnp.logical_and(j == nj - 1, k == nk - 1))
    def _():
        dp2 = dp2_run[...]                                   # (1, ti)
        dn2 = dn2_run[...]                                   # (1, ti)
        anchor_ok = (i * ti + lax.broadcasted_iota(jnp.int32, (1, ti), 1)) < bs
        valid = (dp2 > -jnp.inf) & (dn2 < jnp.inf) & anchor_ok
        # sqrt only on the two reduced (1, ti) rows — O(bs) EUP work.
        dp = jnp.sqrt(jnp.maximum(dp2, 0.0))
        dn = jnp.sqrt(jnp.maximum(jnp.where(valid, dn2, 0.0), 0.0))
        hinge = jnp.maximum(dp - dn + MARGIN, 0.0)
        hinge_ref[...] = jnp.where(valid, hinge, 0.0)
        valid_ref[...] = valid.astype(jnp.float32)


def md_triplet_loss(h1, h2, labels1, labels2, max_candidate_tile=None):
    bs = h1.shape[0]
    h1f = h1.reshape(bs, -1).astype(jnp.float32)
    h2f = h2.reshape(bs, -1).astype(jnp.float32)
    d = h1f.shape[1]

    # Augmented features: single pass over h1/h2 here (fused by XLA); the kernel's
    # NT gram of (a2, a1) then yields d2 directly with f32 accumulation.
    # TODO(synk): optionally cast the -2*h1 / h2 payload columns to bf16 (keeping the
    # norm columns f32) to halve HBM traffic; it changes hardest-pos/neg tie-break
    # numerics vs. the reference, so it stays off by default.
    s1 = jnp.sum(h1f, axis=1, keepdims=True)
    s2 = jnp.sum(h2f, axis=1, keepdims=True)
    sq1 = jnp.sum(h1f * h1f, axis=1, keepdims=True)
    sq2 = jnp.sum(h2f * h2f, axis=1, keepdims=True)
    ones = jnp.ones((bs, 1), jnp.float32)
    c1 = sq1 + (2.0 * EPS) * s1 + jnp.float32(d) * (EPS * EPS)
    c2 = sq2 - (2.0 * EPS) * s2
    a1 = jnp.concatenate([-2.0 * h1f, c1, ones], axis=1)    # (bs, d+2) anchors
    a2 = jnp.concatenate([h2f, ones, c2], axis=1)           # (bs, d+2) candidates
    d_aug = d + 2

    # ---- Tile selection -------------------------------------------------------
    bs_pad = _round_up(bs, 128)

    ti = _pick_tile(bs_pad, 512)                 # anchor tile (lanes of gram/output)
    if bs_pad // ti < 2 and bs_pad > 128:
        ti = _pick_tile(bs_pad, bs_pad // 2)     # >=2 blocks on the parallel axis (v7x 2 TCs)

    d_pad = _round_up(d_aug, 128)
    tk = _pick_tile(d_pad, 1024)                 # feature tile (K of the matmul)
    if tk < 512:
        d_pad512 = _round_up(d_aug, 512)
        if d_pad512 * 4 <= d_pad * 5:            # allow <=25% zero-pad waste for a 512 tile
            d_pad, tk = d_pad512, 512

    tj = _pick_tj(bs_pad, ti, tk, _VMEM_DATA_BUDGET, cap=max_candidate_tile)

    # ---- Padding --------------------------------------------------------------
    a1p = jnp.pad(a1, ((0, bs_pad - bs), (0, d_pad - d_aug)))
    a2p = jnp.pad(a2, ((0, bs_pad - bs), (0, d_pad - d_aug)))
    l1p = jnp.pad(labels1.astype(jnp.int32).reshape(1, bs),
                  ((0, 0), (0, bs_pad - bs)), constant_values=-1)
    l2p = jnp.pad(labels2.astype(jnp.int32).reshape(bs, 1),
                  ((0, bs_pad - bs), (0, 0)), constant_values=-2)

    grid = (bs_pad // ti, bs_pad // tj, d_pad // tk)

    # ---- VMEM accounting (double-buffered blocks + accumulators + temporaries) --
    vmem_need = (2 * (ti + tj) * tk * 4          # a1 / a2 blocks (double-buffered)
                 + 3 * tj * ti * 4               # gram accumulator + epilogue temporaries
                 + 2 * tj * 128 * 4              # labels2 (tj,1) blocks, (8,128) padding
                 + 2 * 8 * ti * 4                # labels1 (1,ti) blocks
                 + 4 * 8 * ti * 4                # hinge/valid output blocks
                 + 2 * 8 * ti * 4                # dp2 / dn2 running rows
                 + (2 << 20))                    # compiler headroom
    vmem_limit = int(min(max(vmem_need, 24 << 20), 56 << 20))   # v7x-safe cap

    cost = pl.CostEstimate(
        flops=2 * bs_pad * bs_pad * d_pad,
        transcendentals=2 * bs_pad,
        bytes_accessed=int(4 * bs_pad * d_pad * ((bs_pad // tj) + (bs_pad // ti))
                           + 4 * 6 * bs_pad),
    )

    kernel = functools.partial(_md_triplet_kernel, bs=bs)

    grid_spec = pltpu.PrefetchScalarGridSpec(
        num_scalar_prefetch=0,
        grid=grid,
        in_specs=[
            pl.BlockSpec((1, ti), lambda i, j, k: (0, i)),     # labels1 (anchors on lanes)
            pl.BlockSpec((tj, 1), lambda i, j, k: (j, 0)),     # labels2 (candidates, tiled)
            pl.BlockSpec((ti, tk), lambda i, j, k: (i, k)),    # augmented anchor tile
            pl.BlockSpec((tj, tk), lambda i, j, k: (j, k)),    # augmented candidate tile
        ],
        out_specs=[
            pl.BlockSpec((1, ti), lambda i, j, k: (0, i)),     # per-anchor hinge
            pl.BlockSpec((1, ti), lambda i, j, k: (0, i)),     # per-anchor validity
        ],
        scratch_shapes=[
            pltpu.VMEM((tj, ti), jnp.float32),   # gram / squared-distance accumulator
            pltpu.VMEM((1, ti), jnp.float32),    # running hardest-positive d^2 (max)
            pltpu.VMEM((1, ti), jnp.float32),    # running hardest-negative d^2 (min)
        ],
    )

    hinge, valid = pl.pallas_call(
        kernel,
        out_shape=(jax.ShapeDtypeStruct((1, bs_pad), jnp.float32),
                   jax.ShapeDtypeStruct((1, bs_pad), jnp.float32)),
        grid_spec=grid_spec,
        compiler_params=pltpu.CompilerParams(
            dimension_semantics=("parallel", "arbitrary", "arbitrary"),
            vmem_limit_bytes=vmem_limit,
        ),
        cost_estimate=cost,
    )(l1p, l2p, a1p, a2p)

    # Padded anchors contribute 0 to both sums; mean over valid anchors, 0.0 fallback
    # (branchless equivalent of the PyTorch early return).
    cnt = jnp.sum(valid)
    tot = jnp.sum(hinge)
    return jnp.where(cnt > 0.0, tot / jnp.maximum(cnt, 1.0), jnp.float32(0.0))


def md_triplet_loss_ref(h1, h2, labels1, labels2):
    """Plain-JAX reference mirroring the PyTorch forward (for sanity check)."""
    bs = h1.shape[0]
    h1f = h1.reshape(bs, -1).astype(jnp.float32)
    h2f = h2.reshape(bs, -1).astype(jnp.float32)
    diff = h1f[:, None, :] - h2f[None, :, :] + EPS
    dist = jnp.sqrt(jnp.sum(diff * diff, axis=-1))
    lbl = labels1.reshape(-1, 1) == labels2.reshape(1, -1)
    valid = jnp.any(lbl, -1) & jnp.any(~lbl, -1)
    dp = jnp.max(jnp.where(lbl, dist, -jnp.inf), -1)
    dn = jnp.min(jnp.where(lbl, jnp.inf, dist), -1)
    per = jnp.where(valid, jnp.maximum(dp - dn + MARGIN, 0.0), 0.0)
    cnt = jnp.sum(valid.astype(jnp.float32))
    return jnp.where(cnt > 0, jnp.sum(per) / jnp.maximum(cnt, 1.0), 0.0)


if __name__ == "__main__":
    key = jax.random.PRNGKey(0)
    keys = jax.random.split(key, 16)

    def check(bs, hidden, n_classes, ks, **kw):
        k1, k2, k3, k4 = ks
        h1 = jax.random.normal(k1, (bs, hidden), dtype=jnp.float32)      # anchors
        h2 = jax.random.normal(k2, (bs, hidden), dtype=jnp.float32)      # pos/neg candidates
        labels1 = jax.random.randint(k3, (bs,), 0, n_classes, dtype=jnp.int32)
        labels2 = jax.random.randint(k4, (bs,), 0, n_classes, dtype=jnp.int32)
        loss = md_triplet_loss(h1, h2, labels1, labels2, **kw)
        jax.block_until_ready(loss)
        ref = md_triplet_loss_ref(h1, h2, labels1, labels2)
        assert jnp.allclose(loss, ref, rtol=2e-3, atol=1e-3), (bs, hidden, float(loss), float(ref))

    check(8, 32, 3, keys[0:4])        # basic small case (single tile)
    check(20, 1100, 4, keys[4:8])     # multiple feature tiles (k accumulation) + padding
    check(260, 64, 5, keys[8:12])     # multiple anchor tiles + padded anchors/candidates
    check(300, 200, 4, keys[12:16],   # force candidate-axis tiling (running max/min path)
          max_candidate_tile=128)

    print("KERNEL_OK")
</pallas_src>

<mosaic_0001>
module attributes {stable_mosaic.version = 11 : i64} {
  func.func @_md_triplet_kernel(%arg0: i32, %arg1: i32, %arg2: i32, %arg3: memref<1x128xi32, #tpu.memory_space<vmem>>, %arg4: memref<128x1xi32, #tpu.memory_space<vmem>>, %arg5: memref<128x128xf32, #tpu.memory_space<vmem>>, %arg6: memref<128x128xf32, #tpu.memory_space<vmem>>, %arg7: memref<1x128xf32, #tpu.memory_space<vmem>>, %arg8: memref<1x128xf32, #tpu.memory_space<vmem>>, %arg9: memref<128x128xf32, #tpu.memory_space<vmem>>, %arg10: memref<1x128xf32, #tpu.memory_space<vmem>>, %arg11: memref<1x128xf32, #tpu.memory_space<vmem>>) attributes {dimension_semantics = [#tpu.dimension_semantics<parallel>, #tpu.dimension_semantics<arbitrary>, #tpu.dimension_semantics<arbitrary>], iteration_bounds = array<i64: 1, 1, 1>, scalar_prefetch = 0 : i64, scratch_operands = 3 : i64, tpu.core_type = #tpu.core_type<tc>, window_params = [{transform_indices = @transform_0, window_bounds = array<i64: 1, 128>}, {transform_indices = @transform_1, window_bounds = array<i64: 128, 1>}, {transform_indices = @transform_2, window_bounds = array<i64: 128, 128>}, {transform_indices = @transform_3, window_bounds = array<i64: 128, 128>}, {transform_indices = @transform_4, window_bounds = array<i64: 1, 128>}, {transform_indices = @transform_5, window_bounds = array<i64: 1, 128>}]} {
    %c0_i32 = arith.constant 0 : i32
    %0 = arith.cmpi eq, %arg1, %c0_i32 : i32
    %c0_i32_0 = arith.constant 0 : i32
    %1 = arith.cmpi eq, %arg2, %c0_i32_0 : i32
    %2 = arith.andi %0, %1 : i1
    %3 = arith.extui %2 : i1 to i32
    %c0_i32_1 = arith.constant 0 : i32
    %4 = arith.cmpi ne, %3, %c0_i32_1 : i32
    scf.if %4 {
      %cst_16 = arith.constant 0xFF800000 : f32
      %22 = vector.broadcast %cst_16 : f32 to vector<1x128xf32>
      %c0_17 = arith.constant 0 : index
      %c0_18 = arith.constant 0 : index
      %23 = vector.load %arg10[%c0_17, %c0_18] : memref<1x128xf32, #tpu.memory_space<vmem>>, vector<1x128xf32>
      tpu.vector_store %arg10[%c0_17, %c0_18], %22 {strides = array<i32>} : memref<1x128xf32, #tpu.memory_space<vmem>>, vector<1x128xf32>,
      %cst_19 = arith.constant 0x7F800000 : f32
      %24 = vector.broadcast %cst_19 : f32 to vector<1x128xf32>
      %c0_20 = arith.constant 0 : index
      %c0_21 = arith.constant 0 : index
      %25 = vector.load %arg11[%c0_20, %c0_21] : memref<1x128xf32, #tpu.memory_space<vmem>>, vector<1x128xf32>
      tpu.vector_store %arg11[%c0_20, %c0_21], %24 {strides = array<i32>} : memref<1x128xf32, #tpu.memory_space<vmem>>, vector<1x128xf32>,
    } else {
    }
    %c0_i32_2 = arith.constant 0 : i32
    %5 = arith.cmpi eq, %arg2, %c0_i32_2 : i32
    %6 = arith.extui %5 : i1 to i32
    %c0_i32_3 = arith.constant 0 : i32
    %7 = arith.cmpi ne, %6, %c0_i32_3 : i32
    scf.if %7 {
      %cst_16 = arith.constant 0.000000e+00 : f32
      %22 = vector.broadcast %cst_16 : f32 to vector<128x128xf32>
      %c0_17 = arith.constant 0 : index
      %c0_18 = arith.constant 0 : index
      %23 = vector.load %arg9[%c0_17, %c0_18] : memref<128x128xf32, #tpu.memory_space<vmem>>, vector<128x128xf32>
      tpu.vector_store %arg9[%c0_17, %c0_18], %22 {strides = array<i32>} : memref<128x128xf32, #tpu.memory_space<vmem>>, vector<128x128xf32>,
    } else {
    }
    %c0 = arith.constant 0 : index
    %c0_4 = arith.constant 0 : index
    %8 = vector.load %arg9[%c0, %c0_4] : memref<128x128xf32, #tpu.memory_space<vmem>>, vector<128x128xf32>
    %c0_5 = arith.constant 0 : index
    %c0_6 = arith.constant 0 : index
    %9 = vector.load %arg6[%c0_5, %c0_6] : memref<128x128xf32, #tpu.memory_space<vmem>>, vector<128x128xf32>
    %c0_7 = arith.constant 0 : index
    %c0_8 = arith.constant 0 : index
    %10 = vector.load %arg5[%c0_7, %c0_8] : memref<128x128xf32, #tpu.memory_space<vmem>>, vector<128x128xf32>
    %cst = arith.constant dense<0.000000e+00> : vector<128x128xf32>
    %11 = tpu.matmul %9, %10, %cst {dimension_numbers = #tpu.dot_dimension_numbers<[1], [1], [0], [0], [0, 0, 1, 0], [], []>} : vector<128x128xf32>, vector<128x128xf32>, vector<128x128xf32> -> vector<128x128xf32>
    %12 = arith.addf %8, %11 : vector<128x128xf32>
    %c0_9 = arith.constant 0 : index
    %c0_10 = arith.constant 0 : index
    %13 = vector.load %arg9[%c0_9, %c0_10] : memref<128x128xf32, #tpu.memory_space<vmem>>, vector<128x128xf32>
    tpu.vector_store %arg9[%c0_9, %c0_10], %12 {strides = array<i32>} : memref<128x128xf32, #tpu.memory_space<vmem>>, vector<128x128xf32>,
    %c0_i32_11 = arith.constant 0 : i32
    %14 = arith.cmpi eq, %arg2, %c0_i32_11 : i32
    %15 = arith.extui %14 : i1 to i32
    %c0_i32_12 = arith.constant 0 : i32
    %16 = arith.cmpi ne, %15, %c0_i32_12 : i32
    scf.if %16 {
      %c0_16 = arith.constant 0 : index
      %c0_17 = arith.constant 0 : index
      %22 = vector.load %arg9[%c0_16, %c0_17] : memref<128x128xf32, #tpu.memory_space<vmem>>, vector<128x128xf32>
      %c0_18 = arith.constant 0 : index
      %c0_19 = arith.constant 0 : index
      %23 = vector.load %arg4[%c0_18, %c0_19] : memref<128x1xi32, #tpu.memory_space<vmem>>, vector<128x1xi32>
      %c0_20 = arith.constant 0 : index
      %c0_21 = arith.constant 0 : index
      %24 = vector.load %arg3[%c0_20, %c0_21] : memref<1x128xi32, #tpu.memory_space<vmem>>, vector<1x128xi32>
      %25 = vector.broadcast %23 : vector<128x1xi32> to vector<128x128xi32>
      %26 = vector.broadcast %24 : vector<1x128xi32> to vector<128x128xi32>
      %27 = arith.cmpi eq, %25, %26 : vector<128x128xi32>
      %c128_i32 = arith.constant 128 : i32
      %28 = arith.muli %arg1, %c128_i32 : i32
      %29 = tpu.iota {dimensions = array<i32: 0>} : vector<128x128xi32>
      %30 = vector.broadcast %28 : i32 to vector<128x128xi32>
      %31 = arith.addi %30, %29 : vector<128x128xi32>
      %c8_i32 = arith.constant 8 : i32
      %32 = vector.broadcast %c8_i32 : i32 to vector<128x128xi32>
      %33 = arith.cmpi slt, %31, %32 : vector<128x128xi32>
      %34 = arith.andi %27, %33 : vector<128x128xi1>
      %cst_22 = arith.constant dense<true> : vector<128x128xi1>
      %35 = arith.xori %27, %cst_22 : vector<128x128xi1>
      %36 = arith.andi %35, %33 : vector<128x128xi1>
      %c0_23 = arith.constant 0 : index
      %c0_24 = arith.constant 0 : index
      %37 = vector.load %arg10[%c0_23, %c0_24] : memref<1x128xf32, #tpu.memory_space<vmem>>, vector<1x128xf32>
      %cst_25 = arith.constant 0xFF800000 : f32
      %38 = vector.broadcast %cst_25 : f32 to vector<128x128xf32>
      %39 = arith.select %34, %22, %38 : vector<128x128xi1>, vector<128x128xf32>
      %cst_26 = arith.constant dense<0xFF800000> : vector<128xf32>
      %40 = vector.multi_reduction <maximumf>, %39, %cst_26 [0] : vector<128x128xf32> to vector<128xf32>
      %41 = vector.shape_cast %40 : vector<128xf32> to vector<1x128xf32>
      %42 = arith.maximumf %37, %41 : vector<1x128xf32>
      %c0_27 = arith.constant 0 : index
      %c0_28 = arith.constant 0 : index
      %43 = vector.load %arg10[%c0_27, %c0_28] : memref<1x128xf32, #tpu.memory_space<vmem>>, vector<1x128xf32>
      tpu.vector_store %arg10[%c0_27, %c0_28], %42 {strides = array<i32>} : memref<1x128xf32, #tpu.memory_space<vmem>>, vector<1x128xf32>,
      %c0_29 = arith.constant 0 : index
      %c0_30 = arith.constant 0 : index
      %44 = vector.load %arg11[%c0_29, %c0_30] : memref<1x128xf32, #tpu.memory_space<vmem>>, vector<1x128xf32>
      %cst_31 = arith.constant 0x7F800000 : f32
      %45 = vector.broadcast %cst_31 : f32 to vector<128x128xf32>
      %46 = arith.select %36, %22, %45 : vector<128x128xi1>, vector<128x128xf32>
      %cst_32 = arith.constant dense<0x7F800000> : vector<128xf32>
      %47 = vector.multi_reduction <minimumf>, %46, %cst_32 [0] : vector<128x128xf32> to vector<128xf32>
      %48 = vector.shape_cast %47 : vector<128xf32> to vector<1x128xf32>
      %49 = arith.minimumf %44, %48 : vector<1x128xf32>
      %c0_33 = arith.constant 0 : index
      %c0_34 = arith.constant 0 : index
      %50 = vector.load %arg11[%c0_33, %c0_34] : memref<1x128xf32, #tpu.memory_space<vmem>>, vector<1x128xf32>
      tpu.vector_store %arg11[%c0_33, %c0_34], %49 {strides = array<i32>} : memref<1x128xf32, #tpu.memory_space<vmem>>, vector<1x128xf32>,
    } else {
    }
    %c0_i32_13 = arith.constant 0 : i32
    %17 = arith.cmpi eq, %arg1, %c0_i32_13 : i32
    %c0_i32_14 = arith.constant 0 : i32
    %18 = arith.cmpi eq, %arg2, %c0_i32_14 : i32
    %19 = arith.andi %17, %18 : i1
    %20 = arith.extui %19 : i1 to i32
    %c0_i32_15 = arith.constant 0 : i32
    %21 = arith.cmpi ne, %20, %c0_i32_15 : i32
    scf.if %21 {
      %c0_16 = arith.constant 0 : index
      %c0_17 = arith.constant 0 : index
      %22 = vector.load %arg10[%c0_16, %c0_17] : memref<1x128xf32, #tpu.memory_space<vmem>>, vector<1x128xf32>
      %c0_18 = arith.constant 0 : index
      %c0_19 = arith.constant 0 : index
      %23 = vector.load %arg11[%c0_18, %c0_19] : memref<1x128xf32, #tpu.memory_space<vmem>>, vector<1x128xf32>
      %c128_i32 = arith.constant 128 : i32
      %24 = arith.muli %arg0, %c128_i32 : i32
      %25 = tpu.iota {dimensions = array<i32: 1>} : vector<1x128xi32>
      %26 = vector.broadcast %24 : i32 to vector<1x128xi32>
      %27 = arith.addi %26, %25 : vector<1x128xi32>
      %c8_i32 = arith.constant 8 : i32
      %28 = vector.broadcast %c8_i32 : i32 to vector<1x128xi32>
      %29 = arith.cmpi slt, %27, %28 : vector<1x128xi32>
      %cst_20 = arith.constant 0xFF800000 : f32
      %30 = vector.broadcast %cst_20 : f32 to vector<1x128xf32>
      %31 = arith.cmpf ogt, %22, %30 : vector<1x128xf32>
      %cst_21 = arith.constant 0x7F800000 : f32
      %32 = vector.broadcast %cst_21 : f32 to vector<1x128xf32>
      %33 = arith.cmpf olt, %23, %32 : vector<1x128xf32>
      %34 = arith.andi %31, %33 : vector<1x128xi1>
      %35 = arith.andi %34, %29 : vector<1x128xi1>
      %cst_22 = arith.constant 0.000000e+00 : f32
      %36 = vector.broadcast %cst_22 : f32 to vector<1x128xf32>
      %37 = arith.maximumf %22, %36 : vector<1x128xf32>
      %38 = math.sqrt %37 : vector<1x128xf32>
      %cst_23 = arith.constant 0.000000e+00 : f32
      %39 = vector.broadcast %cst_23 : f32 to vector<1x128xf32>
      %40 = arith.select %35, %23, %39 : vector<1x128xi1>, vector<1x128xf32>
      %cst_24 = arith.constant 0.000000e+00 : f32
      %41 = vector.broadcast %cst_24 : f32 to vector<1x128xf32>
      %42 = arith.maximumf %40, %41 : vector<1x128xf32>
      %43 = math.sqrt %42 : vector<1x128xf32>
      %44 = arith.subf %38, %43 : vector<1x128xf32>
      %cst_25 = arith.constant 0.000000e+00 : f32
      %45 = vector.broadcast %cst_25 : f32 to vector<1x128xf32>
      %46 = arith.addf %44, %45 : vector<1x128xf32>
      %cst_26 = arith.constant 0.000000e+00 : f32
      %47 = vector.broadcast %cst_26 : f32 to vector<1x128xf32>
      %48 = arith.maximumf %46, %47 : vector<1x128xf32>
      %cst_27 = arith.constant 0.000000e+00 : f32
      %49 = vector.broadcast %cst_27 : f32 to vector<1x128xf32>
      %50 = arith.select %35, %48, %49 : vector<1x128xi1>, vector<1x128xf32>
      %c0_28 = arith.constant 0 : index
      %c0_29 = arith.constant 0 : index
      %51 = vector.load %arg7[%c0_28, %c0_29] : memref<1x128xf32, #tpu.memory_space<vmem>>, vector<1x128xf32>
      tpu.vector_store %arg7[%c0_28, %c0_29], %50 {strides = array<i32>} : memref<1x128xf32, #tpu.memory_space<vmem>>, vector<1x128xf32>,
      %52 = arith.extui %35 : vector<1x128xi1> to vector<1x128xi32>
      %53 = arith.sitofp %52 : vector<1x128xi32> to vector<1x128xf32>
      %c0_30 = arith.constant 0 : index
      %c0_31 = arith.constant 0 : index
      %54 = vector.load %arg8[%c0_30, %c0_31] : memref<1x128xf32, #tpu.memory_space<vmem>>, vector<1x128xf32>
      tpu.vector_store %arg8[%c0_30, %c0_31], %53 {strides = array<i32>} : memref<1x128xf32, #tpu.memory_space<vmem>>, vector<1x128xf32>,
    } else {
    }
    return
  }
  func.func @transform_0(%arg0: i32, %arg1: i32, %arg2: i32) -> (i32, i32) {
    %c0_i32 = arith.constant 0 : i32
    %c0_i32_0 = arith.constant 0 : i32
    return %c0_i32, %arg0 : i32, i32
  }
  func.func @transform_1(%arg0: i32, %arg1: i32, %arg2: i32) -> (i32, i32) {
    %c0_i32 = arith.constant 0 : i32
    %c0_i32_0 = arith.constant 0 : i32
    return %arg1, %c0_i32 : i32, i32
  }
  func.func @transform_2(%arg0: i32, %arg1: i32, %arg2: i32) -> (i32, i32) {
    %c0_i32 = arith.constant 0 : i32
    return %arg0, %arg2 : i32, i32
  }
  func.func @transform_3(%arg0: i32, %arg1: i32, %arg2: i32) -> (i32, i32) {
    %c0_i32 = arith.constant 0 : i32
    return %arg1, %arg2 : i32, i32
  }
  func.func @transform_4(%arg0: i32, %arg1: i32, %arg2: i32) -> (i32, i32) {
    %c0_i32 = arith.constant 0 : i32
    %c0_i32_0 = arith.constant 0 : i32
    return %c0_i32, %arg0 : i32, i32
  }
  func.func @transform_5(%arg0: i32, %arg1: i32, %arg2: i32) -> (i32, i32) {
    %c0_i32 = arith.constant 0 : i32
    %c0_i32_0 = arith.constant 0 : i32
    return %c0_i32, %arg0 : i32, i32
  }
}

</mosaic_0001>

<llo_original>
// kernel: tpu_custom_call.1
$region0: #{tpu_custom_call.1}
  #allocation0 [shape = 'u32[]', space=smem, size = 0x4, offset = 0x4, fixed_abs, tag = 'smem constant byte address 0x4 - core index']
  #allocation1 [shape = 'u32[144,128]{1,0:T(1,128)}', space=vmem, size = 0x12000, scoped, tag = 'internal scratch']
  #allocation2 [shape = 'f32[128,128]{1,0:T(8,128)}', space=vmem, size = 0x10000, scoped, tag = 'scratch operand']
  #allocation3 [shape = 'f32[1,128]{1,0:T(1,128)}', space=vmem, size = 0x200, scoped, tag = 'scratch operand']
  #allocation4 [shape = 'f32[1,128]{1,0:T(1,128)}', space=vmem, size = 0x200, scoped, tag = 'scratch operand']
  %s0 = inlined_call_operand.vmem [shape: s32[1,128], index: 0, kind: input, shape index: {}]
  %s1 = inlined_call_operand.vmem [shape: s32[128,1], index: 1, kind: input, shape index: {}]
  %s2 = inlined_call_operand.vmem [shape: f32[128,128], index: 2, kind: input, shape index: {}]
  %s3 = inlined_call_operand.hbm [shape: f32[128,128], index: 3, kind: input, shape index: {}]
  %s4 = inlined_call_operand.hbm [shape: f32[1,128], index: 4, kind: output, shape index: {0}]
  %s5 = inlined_call_operand.hbm [shape: f32[1,128], index: 5, kind: output, shape index: {1}]
  %6 = xla_tuple %s4, %s5
  %s7 = sld [smem:[#allocation0]]
  $region54: #{tpu_custom_call.1} parent=0
    _
  %s9 = ssub.s32 1, %s7
  %s10 = scalar_select 0, %s9, %s7
  $region1: #{tpu_custom_call.1} parent=0
    #allocation5 [shape = 'u8[65536]{0}', space=vmem, size = 0x10000, scoped, tag = 'input window, operand 3, single buffered']
    #allocation6 [shape = 's32[1]{0}', space=sflag, size = 0x4, scoped, tag = 'scoped memory for tpu_custom_call.1']
    #allocation7 [shape = 's32[1]{0}', space=sflag, size = 0x4, scoped, tag = 'scoped memory for tpu_custom_call.1']
    #allocation8 [shape = 'u8[512]{0}', space=vmem, size = 0x400, scoped, tag = 'output window, operand 0, single buffered']
    #allocation9 [shape = 'u8[512]{0}', space=vmem, size = 0x400, scoped, tag = 'output window, operand 1, single buffered']
    #allocation10 [shape = 's32[1]{0}', space=sflag, size = 0x4, scoped, tag = 'scoped memory for tpu_custom_call.1']
    %11 = vsyncpa [#allocation6], 0
    %12 = vsyncpa [#allocation7], 0
    %13 = vsyncpa [#allocation10], 0
    // Predicated region
    $region2: #{tpu_custom_call.1} parent=1 // pred_check
      _
    $region3: #{tpu_custom_call.1} parent=1 // pred_check_branch
      %15 = sbr.rel (0) target = $region5
    $region4: #{tpu_custom_call.1} parent=1 // pred_region
      _
    $region5: #{tpu_custom_call.1} parent=1 // pred_fallthru
      _
    // Predicated region
    $region6: #{tpu_custom_call.1} parent=1 // pred_check
      _
    $region7: #{tpu_custom_call.1} parent=1 // pred_check_branch
      %17 = sbr.rel (0) target = $region9
    $region8: #{tpu_custom_call.1} parent=1 // pred_region
      _
    $region9: #{tpu_custom_call.1} parent=1 // pred_fallthru
      _
    // Predicated region
    $region10: #{tpu_custom_call.1} parent=1 // pred_check
      _
    $region11: #{tpu_custom_call.1} parent=1 // pred_check_branch
      %19 = sbr.rel (0) target = $region13
    $region12: #{tpu_custom_call.1} parent=1 // pred_region
      _
    $region13: #{tpu_custom_call.1} parent=1 // pred_fallthru
      _
    // Predicated region
    $region14: #{tpu_custom_call.1} parent=1 // pred_check
      _
    $region15: #{tpu_custom_call.1} parent=1 // pred_check_branch
      %21 = sbr.rel (0) target = $region17
    $region16: #{tpu_custom_call.1} parent=1 // pred_region
      %s23 = ssub.s32 2048, 2048
      %24 = vsyncadd [#allocation6], %s23
      %s25 = sshll.u32 [#allocation5], 4
      %s26 = int_to_ptr.vmem [resolvable:$true] %s25
      %31 = dma.hbm_to_vmem [thread:$0]  %s3, 2048, %s26, [#allocation6], 128, 128, 8
    $region17: #{tpu_custom_call.1} parent=1 // pred_fallthru
      _
    // Predicated region
    $region18: #{tpu_custom_call.1} parent=1 // pred_check
      _
    $region19: #{tpu_custom_call.1} parent=1 // pred_check_branch
      %33 = sbr.rel (0) target = $region21
    $region20: #{tpu_custom_call.1} parent=1 // pred_region
      %34 = dma.done [#allocation6], 2048
    $region21: #{tpu_custom_call.1} parent=1 // pred_fallthru
      _
    %p35 = scmp.eq.s32.totalorder 0, 0
    %p36 = scmp.eq.s32.totalorder 0, 0
    %p37 = pnand %p35, %p36
    %p38 = pneg %p37
    // Predicated region
    $region22: #{tpu_custom_call.1} parent=1 // pred_check
      _
    $region23: #{tpu_custom_call.1} parent=1 // pred_check_branch
      %40 = sbr.rel (%p37) target = $region25
    $region24: #{tpu_custom_call.1} parent=1 // pred_region
      %41 = vst [vmem:[#allocation3] sm:$0x1] -inf
      %42 = vst [vmem:[#allocation4] sm:$0x1] inf
    $region25: #{tpu_custom_call.1} parent=1 // pred_fallthru
      _
    // Predicated region
    $region26: #{tpu_custom_call.1} parent=1 // pred_check
      %p43 = pneg %p36
    $region27: #{tpu_custom_call.1} parent=1 // pred_check_branch
      %45 = sbr.rel (%p43) target = $region29
    $region28: #{tpu_custom_call.1} parent=1 // pred_region
      %46 = vst [vmem:[#allocation2] sm:$0xff] 0.0
      %47 = vst [vmem:[#allocation2 + $0x8] sm:$0xff] 0.0
      %48 = vst [vmem:[#allocation2 + $0x10] sm:$0xff] 0.0
      %49 = vst [vmem:[#allocation2 + $0x18] sm:$0xff] 0.0
      %50 = vst [vmem:[#allocation2 + $0x20] sm:$0xff] 0.0
      %51 = vst [vmem:[#allocation2 + $0x28] sm:$0xff] 0.0
      %52 = vst [vmem:[#allocation2 + $0x30] sm:$0xff] 0.0
      %53 = vst [vmem:[#allocation2 + $0x38] sm:$0xff] 0.0
      %54 = vst [vmem:[#allocation2 + $0x40] sm:$0xff] 0.0
      %55 = vst [vmem:[#allocation2 + $0x48] sm:$0xff] 0.0
      %56 = vst [vmem:[#allocation2 + $0x50] sm:$0xff] 0.0
      %57 = vst [vmem:[#allocation2 + $0x58] sm:$0xff] 0.0
      %58 = vst [vmem:[#allocation2 + $0x60] sm:$0xff] 0.0
      %59 = vst [vmem:[#allocation2 + $0x68] sm:$0xff] 0.0
      %60 = vst [vmem:[#allocation2 + $0x70] sm:$0xff] 0.0
      %61 = vst [vmem:[#allocation2 + $0x78] sm:$0xff] 0.0
    $region29: #{tpu_custom_call.1} parent=1 // pred_fallthru
      _
    %v62 = vld [vmem:[#allocation2] sm:$0xff]
    %v63 = vld [vmem:[#allocation2 + $0x8] sm:$0xff]
    %v64 = vld [vmem:[#allocation2 + $0x10] sm:$0xff]
    %v65 = vld [vmem:[#allocation2 + $0x18] sm:$0xff]
    %v66 = vld [vmem:[#allocation2 + $0x20] sm:$0xff]
    %v67 = vld [vmem:[#allocation2 + $0x28] sm:$0xff]
    %v68 = vld [vmem:[#allocation2 + $0x30] sm:$0xff]
    %v69 = vld [vmem:[#allocation2 + $0x38] sm:$0xff]
    %v70 = vld [vmem:[#allocation2 + $0x40] sm:$0xff]
    %v71 = vld [vmem:[#allocation2 + $0x48] sm:$0xff]
    %v72 = vld [vmem:[#allocation2 + $0x50] sm:$0xff]
    %v73 = vld [vmem:[#allocation2 + $0x58] sm:$0xff]
    %v74 = vld [vmem:[#allocation2 + $0x60] sm:$0xff]
    %v75 = vld [vmem:[#allocation2 + $0x68] sm:$0xff]
    %v76 = vld [vmem:[#allocation2 + $0x70] sm:$0xff]
    %v77 = vld [vmem:[#allocation2 + $0x78] sm:$0xff]
    %v78 = vld [vmem:[#allocation5] sm:$0xff]
    %v79 = vld [vmem:[#allocation5 + $0x8] sm:$0xff]
    %v80 = vld [vmem:[#allocation5 + $0x10] sm:$0xff]
    %v81 = vld [vmem:[#allocation5 + $0x18] sm:$0xff]
    %v82 = vld [vmem:[#allocation5 + $0x20] sm:$0xff]
    %v83 = vld [vmem:[#allocation5 + $0x28] sm:$0xff]
    %v84 = vld [vmem:[#allocation5 + $0x30] sm:$0xff]
    %v85 = vld [vmem:[#allocation5 + $0x38] sm:$0xff]
    %v86 = vld [vmem:[#allocation5 + $0x40] sm:$0xff]
    %v87 = vld [vmem:[#allocation5 + $0x48] sm:$0xff]
    %v88 = vld [vmem:[#allocation5 + $0x50] sm:$0xff]
    %v89 = vld [vmem:[#allocation5 + $0x58] sm:$0xff]
    %v90 = vld [vmem:[#allocation5 + $0x60] sm:$0xff]
    %v91 = vld [vmem:[#allocation5 + $0x68] sm:$0xff]
    %v92 = vld [vmem:[#allocation5 + $0x70] sm:$0xff]
    %v93 = vld [vmem:[#allocation5 + $0x78] sm:$0xff]
    %v94 = vld [vmem:[%s2] sm:$0xff]
    %v95 = vld [vmem:[%s2 + $0x8] sm:$0xff]
    %v96 = vld [vmem:[%s2 + $0x10] sm:$0xff]
    %v97 = vld [vmem:[%s2 + $0x18] sm:$0xff]
    %v98 = vld [vmem:[%s2 + $0x20] sm:$0xff]
    %v99 = vld [vmem:[%s2 + $0x28] sm:$0xff]
    %v100 = vld [vmem:[%s2 + $0x30] sm:$0xff]
    %v101 = vld [vmem:[%s2 + $0x38] sm:$0xff]
    %v102 = vld [vmem:[%s2 + $0x40] sm:$0xff]
    %v103 = vld [vmem:[%s2 + $0x48] sm:$0xff]
    %v104 = vld [vmem:[%s2 + $0x50] sm:$0xff]
    %v105 = vld [vmem:[%s2 + $0x58] sm:$0xff]
    %v106 = vld [vmem:[%s2 + $0x60] sm:$0xff]
    %v107 = vld [vmem:[%s2 + $0x68] sm:$0xff]
    %v108 = vld [vmem:[%s2 + $0x70] sm:$0xff]
    %v109 = vld [vmem:[%s2 + $0x78] sm:$0xff]
    %110 = vmatprep.subr.mxu0 0.0
    %111 = vmatpush1.xpose.msra.mxu0 %v94
    %112 = vmatprep.subr.mxu0 0.0
    %113 = vmatpush1.xpose.msra.mxu0 %v95
    %114 = vmatprep.subr.mxu0 0.0
    %115 = vmatpush1.xpose.msra.mxu0 %v96
    %116 = vmatprep.subr.mxu0 0.0
    %117 = vmatpush1.xpose.msra.mxu0 %v97
    %118 = vmatprep.subr.mxu0 0.0
    %119 = vmatpush1.xpose.msra.mxu0 %v98
    %120 = vmatprep.subr.mxu0 0.0
    %121 = vmatpush1.xpose.msra.mxu0 %v99
    %122 = vmatprep.subr.mxu0 0.0
    %123 = vmatpush1.xpose.msra.mxu0 %v100
    %124 = vmatprep.subr.mxu0 0.0
    %125 = vmatpush1.xpose.msra.mxu0 %v101
    %126 = vmatprep.subr.mxu0 0.0
    %127 = vmatpush1.xpose.msra.mxu0 %v102
    %128 = vmatprep.subr.mxu0 0.0
    %129 = vmatpush1.xpose.msra.mxu0 %v103
    %130 = vmatprep.subr.mxu0 0.0
    %131 = vmatpush1.xpose.msra.mxu0 %v104
    %132 = vmatprep.subr.mxu0 0.0
    %133 = vmatpush1.xpose.msra.mxu0 %v105
    %134 = vmatprep.subr.mxu0 0.0
    %135 = vmatpush1.xpose.msra.mxu0 %v106
    %136 = vmatprep.subr.mxu0 0.0
    %137 = vmatpush1.xpose.msra.mxu0 %v107
    %138 = vmatprep.subr.mxu0 0.0
    %139 = vmatpush1.xpose.msra.mxu0 %v108
    %140 = vmatprep.subr.mxu0 0.0
    %141 = vmatpush1.xpose.msra.mxu0 %v109
    %142 = vmatprep.subr.mxu0 0.0
    %143 = vmatpush1.xpose.msra.mxu0 0.0
    %144 = vmatprep.subr.mxu0 0.0
    %145 = vmatpush1.xpose.msra.mxu0 0.0
    %146 = vmatprep.subr.mxu0 0.0
    %147 = vmatpush1.xpose.msra.mxu0 0.0
    %148 = vmatprep.subr.mxu0 0.0
    %149 = vmatpush1.xpose.msra.mxu0 0.0
    %150 = vmatprep.subr.mxu0 0.0
    %151 = vmatpush1.xpose.msra.mxu0 0.0
    %152 = vmatprep.subr.mxu0 0.0
    %153 = vmatpush1.xpose.msra.mxu0 0.0
    %154 = vmatprep.subr.mxu0 0.0
    %155 = vmatpush1.xpose.msra.mxu0 0.0
    %156 = vmatprep.subr.mxu0 0.0
    %157 = vmatpush1.xpose.msra.mxu0 0.0
    %158 = vmatprep.subr.mxu0 0.0
    %159 = vmatpush1.xpose.msra.mxu0 0.0
    %160 = vmatprep.subr.mxu0 0.0
    %161 = vmatpush1.xpose.msra.mxu0 0.0
    %162 = vmatprep.subr.mxu0 0.0
    %163 = vmatpush1.xpose.msra.mxu0 0.0
    %164 = vmatprep.subr.mxu0 0.0
    %165 = vmatpush1.xpose.msra.mxu0 0.0
    %166 = vmatprep.subr.mxu0 0.0
    %167 = vmatpush1.xpose.msra.mxu0 0.0
    %168 = vmatprep.subr.mxu0 0.0
    %169 = vmatpush1.xpose.msra.mxu0 0.0
    %170 = vmatprep.subr.mxu0 0.0
    %171 = vmatpush1.xpose.msra.mxu0 0.0
    %172 = vmatprep.subr.mxu0 0.0
    %173 = vmatpush1.xpose.msra.mxu0 0.0
    %174 = vmatprep.mubr.f32.mxu0 0.0
    %175 = vmatmul.mubr.f32.gmra.mrb[0].mxu0 %v78
    %v176 = vpop.f32.mrb[0].mxu0
    %v177 = vadd.f32 0.0, %v176
    %v178 = vpop.f32.mrb[0].mxu0
    %179 = vmatprep.mubr.f32.mxu0 0.0
    %180 = vmatmul.mubr.f32.gmra.mrb[0].mxu0 %v79
    %v181 = vpop.f32.mrb[0].mxu0
    %v182 = vadd.f32 0.0, %v181
    %v183 = vpop.f32.mrb[0].mxu0
    %184 = vmatprep.mubr.f32.mxu0 0.0
    %185 = vmatmul.mubr.f32.gmra.mrb[0].mxu0 %v80
    %v186 = vpop.f32.mrb[0].mxu0
    %v187 = vadd.f32 0.0, %v186
    %v188 = vpop.f32.mrb[0].mxu0
    %189 = vmatprep.mubr.f32.mxu0 0.0
    %190 = vmatmul.mubr.f32.gmra.mrb[0].mxu0 %v81
    %v191 = vpop.f32.mrb[0].mxu0
    %v192 = vadd.f32 0.0, %v191
    %v193 = vpop.f32.mrb[0].mxu0
    %194 = vmatprep.mubr.f32.mxu0 0.0
    %195 = vmatmul.mubr.f32.gmra.mrb[0].mxu0 %v82
    %v196 = vpop.f32.mrb[0].mxu0
    %v197 = vadd.f32 0.0, %v196
    %v198 = vpop.f32.mrb[0].mxu0
    %199 = vmatprep.mubr.f32.mxu0 0.0
    %200 = vmatmul.mubr.f32.gmra.mrb[0].mxu0 %v83
    %v201 = vpop.f32.mrb[0].mxu0
    %v202 = vadd.f32 0.0, %v201
    %v203 = vpop.f32.mrb[0].mxu0
    %204 = vmatprep.mubr.f32.mxu0 0.0
    %205 = vmatmul.mubr.f32.gmra.mrb[0].mxu0 %v84
    %v206 = vpop.f32.mrb[0].mxu0
    %v207 = vadd.f32 0.0, %v206
    %v208 = vpop.f32.mrb[0].mxu0
    %209 = vmatprep.mubr.f32.mxu0 0.0
    %210 = vmatmul.mubr.f32.gmra.mrb[0].mxu0 %v85
    %v211 = vpop.f32.mrb[0].mxu0
    %v212 = vadd.f32 0.0, %v211
    %v213 = vpop.f32.mrb[0].mxu0
    %214 = vmatprep.mubr.f32.mxu0 0.0
    %215 = vmatmul.mubr.f32.gmra.mrb[0].mxu0 %v86
    %v216 = vpop.f32.mrb[0].mxu0
    %v217 = vadd.f32 0.0, %v216
    %v218 = vpop.f32.mrb[0].mxu0
    %219 = vmatprep.mubr.f32.mxu0 0.0
    %220 = vmatmul.mubr.f32.gmra.mrb[0].mxu0 %v87
    %v221 = vpop.f32.mrb[0].mxu0
    %v222 = vadd.f32 0.0, %v221
    %v223 = vpop.f32.mrb[0].mxu0
    %224 = vmatprep.mubr.f32.mxu0 0.0
    %225 = vmatmul.mubr.f32.gmra.mrb[0].mxu0 %v88
    %v226 = vpop.f32.mrb[0].mxu0
    %v227 = vadd.f32 0.0, %v226
    %v228 = vpop.f32.mrb[0].mxu0
    %229 = vmatprep.mubr.f32.mxu0 0.0
    %230 = vmatmul.mubr.f32.gmra.mrb[0].mxu0 %v89
    %v231 = vpop.f32.mrb[0].mxu0
    %v232 = vadd.f32 0.0, %v231
    %v233 = vpop.f32.mrb[0].mxu0
    %234 = vmatprep.mubr.f32.mxu0 0.0
    %235 = vmatmul.mubr.f32.gmra.mrb[0].mxu0 %v90
    %v236 = vpop.f32.mrb[0].mxu0
    %v237 = vadd.f32 0.0, %v236
    %v238 = vpop.f32.mrb[0].mxu0
    %239 = vmatprep.mubr.f32.mxu0 0.0
    %240 = vmatmul.mubr.f32.gmra.mrb[0].mxu0 %v91
    %v241 = vpop.f32.mrb[0].mxu0
    %v242 = vadd.f32 0.0, %v241
    %v243 = vpop.f32.mrb[0].mxu0
    %244 = vmatprep.mubr.f32.mxu0 0.0
    %245 = vmatmul.mubr.f32.gmra.mrb[0].mxu0 %v92
    %v246 = vpop.f32.mrb[0].mxu0
    %v247 = vadd.f32 0.0, %v246
    %v248 = vpop.f32.mrb[0].mxu0
    %249 = vmatprep.mubr.f32.mxu0 0.0
    %250 = vmatmul.mubr.f32.gmra.mrb[0].mxu0 %v93
    %v251 = vpop.f32.mrb[0].mxu0
    %v252 = vadd.f32 0.0, %v251
    %v253 = vpop.f32.mrb[0].mxu0
    %254 = vdwg.mxu0
    %v255 = vadd.f32 %v62, %v177
    %v256 = vadd.f32 %v63, %v182
    %v257 = vadd.f32 %v64, %v187
    %v258 = vadd.f32 %v65, %v192
    %v259 = vadd.f32 %v66, %v197
    %v260 = vadd.f32 %v67, %v202
    %v261 = vadd.f32 %v68, %v207
    %v262 = vadd.f32 %v69, %v212
    %v263 = vadd.f32 %v70, %v217
    %v264 = vadd.f32 %v71, %v222
    %v265 = vadd.f32 %v72, %v227
    %v266 = vadd.f32 %v73, %v232
    %v267 = vadd.f32 %v74, %v237
    %v268 = vadd.f32 %v75, %v242
    %v269 = vadd.f32 %v76, %v247
    %v270 = vadd.f32 %v77, %v252
    %271 = vst [vmem:[#allocation2] sm:$0xff] %v255
    %272 = vst [vmem:[#allocation2 + $0x8] sm:$0xff] %v256
    %273 = vst [vmem:[#allocation2 + $0x10] sm:$0xff] %v257
    %274 = vst [vmem:[#allocation2 + $0x18] sm:$0xff] %v258
    %275 = vst [vmem:[#allocation2 + $0x20] sm:$0xff] %v259
    %276 = vst [vmem:[#allocation2 + $0x28] sm:$0xff] %v260
    %277 = vst [vmem:[#allocation2 + $0x30] sm:$0xff] %v261
    %278 = vst [vmem:[#allocation2 + $0x38] sm:$0xff] %v262
    %279 = vst [vmem:[#allocation2 + $0x40] sm:$0xff] %v263
    %280 = vst [vmem:[#allocation2 + $0x48] sm:$0xff] %v264
    %281 = vst [vmem:[#allocation2 + $0x50] sm:$0xff] %v265
    %282 = vst [vmem:[#allocation2 + $0x58] sm:$0xff] %v266
    %283 = vst [vmem:[#allocation2 + $0x60] sm:$0xff] %v267
    %284 = vst [vmem:[#allocation2 + $0x68] sm:$0xff] %v268
    %285 = vst [vmem:[#allocation2 + $0x70] sm:$0xff] %v269
    %286 = vst [vmem:[#allocation2 + $0x78] sm:$0xff] %v270
    // Predicated region
    $region30: #{tpu_custom_call.1} parent=1 // pred_check
      %p287 = pneg %p36
    $region31: #{tpu_custom_call.1} parent=1 // pred_check_branch
      %289 = sbr.rel (%p287) target = $region33
    $region32: #{tpu_custom_call.1} parent=1 // pred_region
      %v290 = vld [vmem:[#allocation2] sm:$0xff]
      %v291 = vld [vmem:[#allocation2 + $0x8] sm:$0xff]
      %v292 = vld [vmem:[#allocation2 + $0x10] sm:$0xff]
      %v293 = vld [vmem:[#allocation2 + $0x18] sm:$0xff]
      %v294 = vld [vmem:[#allocation2 + $0x20] sm:$0xff]
      %v295 = vld [vmem:[#allocation2 + $0x28] sm:$0xff]
      %v296 = vld [vmem:[#allocation2 + $0x30] sm:$0xff]
      %v297 = vld [vmem:[#allocation2 + $0x38] sm:$0xff]
      %v298 = vld [vmem:[#allocation2 + $0x40] sm:$0xff]
      %v299 = vld [vmem:[#allocation2 + $0x48] sm:$0xff]
      %v300 = vld [vmem:[#allocation2 + $0x50] sm:$0xff]
      %v301 = vld [vmem:[#allocation2 + $0x58] sm:$0xff]
      %v302 = vld [vmem:[#allocation2 + $0x60] sm:$0xff]
      %v303 = vld [vmem:[#allocation2 + $0x68] sm:$0xff]
      %v304 = vld [vmem:[#allocation2 + $0x70] sm:$0xff]
      %v305 = vld [vmem:[#allocation2 + $0x78] sm:$0xff]
      %v306 = vld [vmem:[%s1] sm:$0xff]
      %v307 = vld [vmem:[%s1 + $0x8] sm:$0xff]
      %v308 = vld [vmem:[%s1 + $0x10] sm:$0xff]
      %v309 = vld [vmem:[%s1 + $0x18] sm:$0xff]
      %v310 = vld [vmem:[%s1 + $0x20] sm:$0xff]
      %v311 = vld [vmem:[%s1 + $0x28] sm:$0xff]
      %v312 = vld [vmem:[%s1 + $0x30] sm:$0xff]
      %v313 = vld [vmem:[%s1 + $0x38] sm:$0xff]
      %v314 = vld [vmem:[%s1 + $0x40] sm:$0xff]
      %v315 = vld [vmem:[%s1 + $0x48] sm:$0xff]
      %v316 = vld [vmem:[%s1 + $0x50] sm:$0xff]
      %v317 = vld [vmem:[%s1 + $0x58] sm:$0xff]
      %v318 = vld [vmem:[%s1 + $0x60] sm:$0xff]
      %v319 = vld [vmem:[%s1 + $0x68] sm:$0xff]
      %v320 = vld [vmem:[%s1 + $0x70] sm:$0xff]
      %v321 = vld [vmem:[%s1 + $0x78] sm:$0xff]
      %v322 = vld [vmem:[%s0] sm:$0x1]
      %323 = vset.pattern.permute.xlu0 0
      %324 = vperm.xlu0 %323, %v306
      %v325 = vpop.permute.xlu0 %324
      %326 = vset.pattern.permute.xlu0 0
      %327 = vperm.xlu0 %326, %v307
      %v328 = vpop.permute.xlu0 %327
      %329 = vset.pattern.permute.xlu0 0
      %330 = vperm.xlu0 %329, %v308
      %v331 = vpop.permute.xlu0 %330
      %332 = vset.pattern.permute.xlu0 0
      %333 = vperm.xlu0 %332, %v309
      %v334 = vpop.permute.xlu0 %333
      %335 = vset.pattern.permute.xlu0 0
      %336 = vperm.xlu0 %335, %v310
      %v337 = vpop.permute.xlu0 %336
      %338 = vset.pattern.permute.xlu0 0
      %339 = vperm.xlu0 %338, %v311
      %v340 = vpop.permute.xlu0 %339
      %341 = vset.pattern.permute.xlu0 0
      %342 = vperm.xlu0 %341, %v312
      %v343 = vpop.permute.xlu0 %342
      %344 = vset.pattern.permute.xlu0 0
      %345 = vperm.xlu0 %344, %v313
      %v346 = vpop.permute.xlu0 %345
      %347 = vset.pattern.permute.xlu0 0
      %348 = vperm.xlu0 %347, %v314
      %v349 = vpop.permute.xlu0 %348
      %350 = vset.pattern.permute.xlu0 0
      %351 = vperm.xlu0 %350, %v315
      %v352 = vpop.permute.xlu0 %351
      %353 = vset.pattern.permute.xlu0 0
      %354 = vperm.xlu0 %353, %v316
      %v355 = vpop.permute.xlu0 %354
      %356 = vset.pattern.permute.xlu0 0
      %357 = vperm.xlu0 %356, %v317
      %v358 = vpop.permute.xlu0 %357
      %359 = vset.pattern.permute.xlu0 0
      %360 = vperm.xlu0 %359, %v318
      %v361 = vpop.permute.xlu0 %360
      %362 = vset.pattern.permute.xlu0 0
      %363 = vperm.xlu0 %362, %v319
      %v364 = vpop.permute.xlu0 %363
      %365 = vset.pattern.permute.xlu0 0
      %366 = vperm.xlu0 %365, %v320
      %v367 = vpop.permute.xlu0 %366
      %368 = vset.pattern.permute.xlu0 0
      %369 = vperm.xlu0 %368, %v321
      %v370 = vpop.permute.xlu0 %369
      %v371 = vlaneseq
      %v372 = vshrl.u32 %v371, 7
      %v373 = vsub.s32 0, %v372
      %v374 = vrot.slane %v322, %v373
      %vm375 = vcmp.eq.s32.totalorder %v325, %v374
      %vm376 = vcmp.eq.s32.totalorder %v328, %v374
      %vm377 = vcmp.eq.s32.totalorder %v331, %v374
      %vm378 = vcmp.eq.s32.totalorder %v334, %v374
      %vm379 = vcmp.eq.s32.totalorder %v337, %v374
      %vm380 = vcmp.eq.s32.totalorder %v340, %v374
      %vm381 = vcmp.eq.s32.totalorder %v343, %v374
      %vm382 = vcmp.eq.s32.totalorder %v346, %v374
      %vm383 = vcmp.eq.s32.totalorder %v349, %v374
      %vm384 = vcmp.eq.s32.totalorder %v352, %v374
      %vm385 = vcmp.eq.s32.totalorder %v355, %v374
      %vm386 = vcmp.eq.s32.totalorder %v358, %v374
      %vm387 = vcmp.eq.s32.totalorder %v361, %v374
      %vm388 = vcmp.eq.s32.totalorder %v364, %v374
      %vm389 = vcmp.eq.s32.totalorder %v367, %v374
      %vm390 = vcmp.eq.s32.totalorder %v370, %v374
      %s391 = smul.u32 0, 128
      %v392 = vlaneseq
      %v393 = vshrl.u32 %v392, 7
      %v394 = vadd.s32 %v393, 8
      %v395 = vadd.s32 %v393, 16
      %v396 = vadd.s32 %v393, 24
      %v397 = vadd.s32 %v393, 32
      %v398 = vadd.s32 %v393, 40
      %v399 = vadd.s32 %v393, 48
      %v400 = vadd.s32 %v393, 56
      %v401 = vadd.s32 %v393, 64
      %v402 = vadd.s32 %v393, 72
      %v403 = vadd.s32 %v393, 80
      %v404 = vadd.s32 %v393, 88
      %v405 = vadd.s32 %v393, 96
      %v406 = vadd.s32 %v393, 104
      %v407 = vadd.s32 %v393, 112
      %v408 = vadd.s32 %v393, 120
      %v409 = vstv %s391
      %v410 = vadd.s32 %v409, %v393
      %v411 = vadd.s32 %v409, %v394
      %v412 = vadd.s32 %v409, %v395
      %v413 = vadd.s32 %v409, %v396
      %v414 = vadd.s32 %v409, %v397
      %v415 = vadd.s32 %v409, %v398
      %v416 = vadd.s32 %v409, %v399
      %v417 = vadd.s32 %v409, %v400
      %v418 = vadd.s32 %v409, %v401
      %v419 = vadd.s32 %v409, %v402
      %v420 = vadd.s32 %v409, %v403
      %v421 = vadd.s32 %v409, %v404
      %v422 = vadd.s32 %v409, %v405
      %v423 = vadd.s32 %v409, %v406
      %v424 = vadd.s32 %v409, %v407
      %v425 = vadd.s32 %v409, %v408
      %vm426 = vcmp.lt.s32.totalorder %v410, 8
      %vm427 = vcmp.lt.s32.totalorder %v411, 8
      %vm428 = vcmp.lt.s32.totalorder %v412, 8
      %vm429 = vcmp.lt.s32.totalorder %v413, 8
      %vm430 = vcmp.lt.s32.totalorder %v414, 8
      %vm431 = vcmp.lt.s32.totalorder %v415, 8
      %vm432 = vcmp.lt.s32.totalorder %v416, 8
      %vm433 = vcmp.lt.s32.totalorder %v417, 8
      %vm434 = vcmp.lt.s32.totalorder %v418, 8
      %vm435 = vcmp.lt.s32.totalorder %v419, 8
      %vm436 = vcmp.lt.s32.totalorder %v420, 8
      %vm437 = vcmp.lt.s32.totalorder %v421, 8
      %vm438 = vcmp.lt.s32.totalorder %v422, 8
      %vm439 = vcmp.lt.s32.totalorder %v423, 8
      %vm440 = vcmp.lt.s32.totalorder %v424, 8
      %vm441 = vcmp.lt.s32.totalorder %v425, 8
      %vm442 = vmand %vm375, %vm426
      %vm443 = vmand %vm376, %vm427
      %vm444 = vmand %vm377, %vm428
      %vm445 = vmand %vm378, %vm429
      %vm446 = vmand %vm379, %vm430
      %vm447 = vmand %vm380, %vm431
      %vm448 = vmand %vm381, %vm432
      %vm449 = vmand %vm382, %vm433
      %vm450 = vmand %vm383, %vm434
      %vm451 = vmand %vm384, %vm435
      %vm452 = vmand %vm385, %vm436
      %vm453 = vmand %vm386, %vm437
      %vm454 = vmand %vm387, %vm438
      %vm455 = vmand %vm388, %vm439
      %vm456 = vmand %vm389, %vm440
      %vm457 = vmand %vm390, %vm441
      %vm458 = vmxor %vm375, 1
      %vm459 = vmxor %vm376, 1
      %vm460 = vmxor %vm377, 1
      %vm461 = vmxor %vm378, 1
      %vm462 = vmxor %vm379, 1
      %vm463 = vmxor %vm380, 1
      %vm464 = vmxor %vm381, 1
      %vm465 = vmxor %vm382, 1
      %vm466 = vmxor %vm383, 1
      %vm467 = vmxor %vm384, 1
      %vm468 = vmxor %vm385, 1
      %vm469 = vmxor %vm386, 1
      %vm470 = vmxor %vm387, 1
      %vm471 = vmxor %vm388, 1
      %vm472 = vmxor %vm389, 1
      %vm473 = vmxor %vm390, 1
      %vm474 = vmand %vm458, %vm426
      %vm475 = vmand %vm459, %vm427
      %vm476 = vmand %vm460, %vm428
      %vm477 = vmand %vm461, %vm429
      %vm478 = vmand %vm462, %vm430
      %vm479 = vmand %vm463, %vm431
      %vm480 = vmand %vm464, %vm432
      %vm481 = vmand %vm465, %vm433
      %vm482 = vmand %vm466, %vm434
      %vm483 = vmand %vm467, %vm435
      %vm484 = vmand %vm468, %vm436
      %vm485 = vmand %vm469, %vm437
      %vm486 = vmand %vm470, %vm438
      %vm487 = vmand %vm471, %vm439
      %vm488 = vmand %vm472, %vm440
      %vm489 = vmand %vm473, %vm441
      %v490 = vld [vmem:[#allocation3] sm:$0x1]
      %v491 = vsel %vm442, %v290, -inf
      %v492 = vsel %vm443, %v291, -inf
      %v493 = vsel %vm444, %v292, -inf
      %v494 = vsel %vm445, %v293, -inf
      %v495 = vsel %vm446, %v294, -inf
      %v496 = vsel %vm447, %v295, -inf
      %v497 = vsel %vm448, %v296, -inf
      %v498 = vsel %vm449, %v297, -inf
      %v499 = vsel %vm450, %v298, -inf
      %v500 = vsel %vm451, %v299, -inf
      %v501 = vsel %vm452, %v300, -inf
      %v502 = vsel %vm453, %v301, -inf
      %v503 = vsel %vm454, %v302, -inf
      %v504 = vsel %vm455, %v303, -inf
      %v505 = vsel %vm456, %v304, -inf
      %v506 = vsel %vm457, %v305, -inf
      %v507 = vmax.f32 %v491, %v495
      %v508 = vmax.f32 %v492, %v496
      %v509 = vmax.f32 %v493, %v497
      %v510 = vmax.f32 %v494, %v498
      %v511 = vmax.f32 %v507, %v499
      %v512 = vmax.f32 %v508, %v500
      %v513 = vmax.f32 %v509, %v501
      %v514 = vmax.f32 %v510, %v502
      %v515 = vmax.f32 %v511, %v503
      %v516 = vmax.f32 %v512, %v504
      %v517 = vmax.f32 %v513, %v505
      %v518 = vmax.f32 %v514, %v506
      %v519 = vmax.f32 %v515, %v516
      %v520 = vmax.f32 %v517, %v518
      %v521 = vmax.f32 %v519, %v520
      %v522 = vrot.slane %v521, 4
      %v523 = vmax.f32 %v521, %v522
      %v524 = vrot.slane %v523, 2
      %v525 = vmax.f32 %v523, %v524
      %v526 = vrot.slane %v525, 1
      %v527 = vmax.f32 %v525, %v526
      %v528 = vmax.f32 %v490, %v527
      %529 = vst [vmem:[#allocation3] sm:$0x1] %v528
      %v530 = vld [vmem:[#allocation4] sm:$0x1]
      %v531 = vsel %vm474, %v290, inf
      %v532 = vsel %vm475, %v291, inf
      %v533 = vsel %vm476, %v292, inf
      %v534 = vsel %vm477, %v293, inf
      %v535 = vsel %vm478, %v294, inf
      %v536 = vsel %vm479, %v295, inf
      %v537 = vsel %vm480, %v296, inf
      %v538 = vsel %vm481, %v297, inf
      %v539 = vsel %vm482, %v298, inf
      %v540 = vsel %vm483, %v299, inf
      %v541 = vsel %vm484, %v300, inf
      %v542 = vsel %vm485, %v301, inf
      %v543 = vsel %vm486, %v302, inf
      %v544 = vsel %vm487, %v303, inf
      %v545 = vsel %vm488, %v304, inf
      %v546 = vsel %vm489, %v305, inf
      %v547 = vmin.f32 %v531, %v535
      %v548 = vmin.f32 %v532, %v536
      %v549 = vmin.f32 %v533, %v537
      %v550 = vmin.f32 %v534, %v538
      %v551 = vmin.f32 %v547, %v539
      %v552 = vmin.f32 %v548, %v540
      %v553 = vmin.f32 %v549, %v541
      %v554 = vmin.f32 %v550, %v542
      %v555 = vmin.f32 %v551, %v543
      %v556 = vmin.f32 %v552, %v544
      %v557 = vmin.f32 %v553, %v545
      %v558 = vmin.f32 %v554, %v546
      %v559 = vmin.f32 %v555, %v556
      %v560 = vmin.f32 %v557, %v558
      %v561 = vmin.f32 %v559, %v560
      %v562 = vrot.slane %v561, 4
      %v563 = vmin.f32 %v561, %v562
      %v564 = vrot.slane %v563, 2
      %v565 = vmin.f32 %v563, %v564
      %v566 = vrot.slane %v565, 1
      %v567 = vmin.f32 %v565, %v566
      %v568 = vmin.f32 %v530, %v567
      %569 = vst [vmem:[#allocation4] sm:$0x1] %v568
    $region33: #{tpu_custom_call.1} parent=1 // pred_fallthru
      _
    // Predicated region
    $region34: #{tpu_custom_call.1} parent=1 // pred_check
      _
    $region35: #{tpu_custom_call.1} parent=1 // pred_check_branch
      %571 = sbr.rel (%p37) target = $region37
    $region36: #{tpu_custom_call.1} parent=1 // pred_region
      %v572 = vld [vmem:[#allocation3] sm:$0x1]
      %v573 = vld [vmem:[#allocation4] sm:$0x1]
      %s574 = smul.u32 0, 128
      %v575 = vlaneseq
      %v576 = vand.u32 %v575, 127
      %v577 = vstv %s574
      %v578 = vadd.s32 %v577, %v576
      %vm579 = vcmp.lt.s32.totalorder %v578, 8
      %vm580 = vcmp.gt.f32.partialorder %v572, -inf
      %vm581 = vcmp.lt.f32.partialorder %v573, inf
      %vm582 = vmand %vm580, %vm581
      %vm583 = vmand %vm582, %vm579
      %v584 = vmax.f32 %v572, 0.0
      %v585 = vrsqrt.pop %v584
      %v586 = vmul.f32 %v584, %v585
      %vm587 = vcmp.eq.f32.partialorder %v584, inf
      %v588 = vsel %vm587, %v584, %v586
      %vm589 = vcmp.eq.f32.partialorder %v584, 0.0
      %v590 = vand.u32 %v584, 2147483648
      %v591 = vsel %vm589, %v590, %v588
      %v592 = vsel %vm583, %v573, 0.0
      %v593 = vmax.f32 %v592, 0.0
      %v594 = vrsqrt.pop %v593
      %v595 = vmul.f32 %v593, %v594
      %vm596 = vcmp.eq.f32.partialorder %v593, inf
      %v597 = vsel %vm596, %v593, %v595
      %vm598 = vcmp.eq.f32.partialorder %v593, 0.0
      %v599 = vand.u32 %v593, 2147483648
      %v600 = vsel %vm598, %v599, %v597
      %v601 = vsub.f32 %v591, %v600
      %v602 = vadd.f32 %v601, 0.0
      %v603 = vmax.f32 %v602, 0.0
      %v604 = vsel %vm583, %v603, 0.0
      %605 = vst [vmem:[#allocation8] sm:$0x1] %v604
      %v606 = vsel %vm583, 1, 0
      %v607 = vcvt.s32.f32 %v606
      %608 = vst [vmem:[#allocation9] sm:$0x1] %v607
    $region37: #{tpu_custom_call.1} parent=1 // pred_fallthru
      _
    // Predicated region
    $region38: #{tpu_custom_call.1} parent=1 // pred_check
      _
    $region39: #{tpu_custom_call.1} parent=1 // pred_check_branch
      %610 = sbr.rel (0) target = $region41
    $region40: #{tpu_custom_call.1} parent=1 // pred_region
      %s612 = ssub.s32 16, 16
      %613 = vsyncadd [#allocation7], %s612
      %s615 = sshll.u32 [#allocation8], 4
      %s616 = int_to_ptr.vmem [resolvable:$true] %s615
      %618 = dma.vmem_to_hbm [thread:$0]  %s616, 16, %s4, [#allocation7]
    $region41: #{tpu_custom_call.1} parent=1 // pred_fallthru
      _
    // Predicated region
    $region42: #{tpu_custom_call.1} parent=1 // pred_check
      _
    $region43: #{tpu_custom_call.1} parent=1 // pred_check_branch
      %620 = sbr.rel (0) target = $region45
    $region44: #{tpu_custom_call.1} parent=1 // pred_region
      %s622 = ssub.s32 16, 16
      %623 = vsyncadd [#allocation10], %s622
      %s625 = sshll.u32 [#allocation9], 4
      %s626 = int_to_ptr.vmem [resolvable:$true] %s625
      %628 = dma.vmem_to_hbm [thread:$0]  %s626, 16, %s5, [#allocation10]
    $region45: #{tpu_custom_call.1} parent=1 // pred_fallthru
      _
    // Predicated region
    $region46: #{tpu_custom_call.1} parent=1 // pred_check
      _
    $region47: #{tpu_custom_call.1} parent=1 // pred_check_branch
      %630 = sbr.rel (0) target = $region49
    $region48: #{tpu_custom_call.1} parent=1 // pred_region
      %631 = dma.done [#allocation7], 16
    $region49: #{tpu_custom_call.1} parent=1 // pred_fallthru
      _
    // Predicated region
    $region50: #{tpu_custom_call.1} parent=1 // pred_check
      _
    $region51: #{tpu_custom_call.1} parent=1 // pred_check_branch
      %633 = sbr.rel (0) target = $region53
    $region52: #{tpu_custom_call.1} parent=1 // pred_region
      %634 = dma.done [#allocation10], 16
    $region53: #{tpu_custom_call.1} parent=1 // pred_fallthru
      _
    %635 = vsyncpa [#allocation6], 1
    %636 = vsyncpa [#allocation7], 1
    %637 = vsyncpa [#allocation10], 1

</llo_original>
